<compile_context>
chip_gen: v6e
topology: v6e:2x2x1
jax: 0.10.0
libtpu: 0.0.40
codegen_flags: <defaults>
</compile_context>

<pallas_src>
import functools

import jax
import jax.numpy as jnp
import numpy as np
from jax.experimental import pallas as pl
from jax.experimental.pallas import tpu as pltpu


def _conv_stats_kernel(p_ref, w_ref, s_ref):
    """Pass 1: one im2col MXU matmul per M-tile -> per-block partial (sum, sumsq) only."""
    y = jnp.dot(p_ref[...], w_ref[...], preferred_element_type=jnp.float32)  # (tm, cpad) f32
    s_ref[:, 0:1, :] = jnp.sum(y, axis=0, keepdims=True)[None]       # (1, 1, cpad)
    s_ref[:, 1:2, :] = jnp.sum(y * y, axis=0, keepdims=True)[None]   # (1, 1, cpad)


def _conv_bn_apply_kernel(p_ref, w_ref, scale_ref, shift_ref, o_ref, *, cout):
    """Pass 2: recompute the matmul, apply BN as a single FMA, store only real channels."""
    y = jnp.dot(p_ref[...], w_ref[...], preferred_element_type=jnp.float32)  # (tm, cpad) f32
    o_ref[...] = y[:, :cout] * scale_ref[...] + shift_ref[...]


def _ceil_div(a, b):
    return -(-a // b)


def _round_up(a, b):
    return _ceil_div(a, b) * b


def deconv_batchnorm(x_nchw, weight, bias, gamma, beta, *, stride, padding,
                     eps=1e-5, block_m=1024):
    """ConvTranspose2d (PyTorch weight layout (Cin, Cout, K, K)) + training-mode BatchNorm2d."""
    del bias  # cancels exactly under training-mode BN mean subtraction
    n, cin, h, w = x_nchw.shape
    cin_w, cout, k, _ = weight.shape
    assert cin == cin_w
    ho = (h - 1) * stride - 2 * padding + k
    wo = (w - 1) * stride - 2 * padding + k
    m = n * ho * wo
    kkc = k * k * cin
    cpad = _round_up(cout, 128)                       # lane-dense matmul operand only (VMEM)

    # Keep >= ~4 grid steps when M allows (v7x: two TensorCores share the parallel grid axis).
    block_m = max(256, min(block_m, _round_up(_ceil_div(m, 4), 256)))
    mp = _round_up(m, block_m)
    nb = mp // block_m

    # ---- layout plumbing (plain JAX, outside the kernels) -- all in bf16 ----
    x = jnp.transpose(x_nchw, (0, 2, 3, 1)).astype(jnp.bfloat16)        # NCHW -> NHWC, bf16
    hd, wd = (h - 1) * stride + 1, (w - 1) * stride + 1
    xd = jnp.zeros((n, hd, wd, cin), jnp.bfloat16).at[:, ::stride, ::stride, :].set(x)
    pe = k - 1 - padding
    assert pe >= 0, "requires padding <= kernel_size - 1"
    xp = jnp.pad(xd, ((0, 0), (pe, pe), (pe, pe), (0, 0)))

    # im2col: (Mp, K*K*Cin) bf16, tap-major / channel-minor column order.
    # TODO(synk): assemble this tile-by-tile inside the kernel (halo DMA) instead of in HBM.
    patches = jnp.concatenate(
        [xp[:, a:a + ho, b:b + wo, :].reshape(m, cin)
         for a in range(k) for b in range(k)], axis=1)
    patches = jnp.pad(patches, ((0, mp - m), (0, 0)))   # zero rows are stat-neutral

    # Spatially flipped kernel -> one (K*K*Cin, Cpad) bf16 matrix (padding lives only in VMEM).
    wf = jnp.flip(weight, axis=(2, 3)).transpose(2, 3, 0, 1).reshape(kkc, cout)
    wmat = jnp.pad(wf, ((0, 0), (0, cpad - cout))).astype(jnp.bfloat16)

    cparams = pltpu.CompilerParams(dimension_semantics=("parallel",))

    # ---- pass 1: per-block partial (sum, sumsq); no conv intermediate ever hits HBM ----
    pstats = pl.pallas_call(
        _conv_stats_kernel,
        grid=(nb,),
        in_specs=[pl.BlockSpec((block_m, kkc), lambda i: (i, 0)),
                  pl.BlockSpec((kkc, cpad), lambda i: (0, 0))],
        out_specs=pl.BlockSpec((1, 2, cpad), lambda i: (i, 0, 0)),
        out_shape=jax.ShapeDtypeStruct((nb, 2, cpad), jnp.float32),
        compiler_params=cparams,
    )(patches, wmat)

    # ---- tiny cross-block reduction + BN scale/shift folding (wrapper-side, f32) ----
    stats = jnp.sum(pstats, axis=0)                   # (2, cpad)
    mean = stats[0, :cout] * (1.0 / m)
    ex2 = stats[1, :cout] * (1.0 / m)
    # TODO(synk): for very large M / large |mean| use a shifted (Chan/Welford) stat combine;
    #             the clamp only guards against negative variance from f32 cancellation.
    var = jnp.maximum(ex2 - mean * mean, 0.0)
    scale_v = gamma.astype(jnp.float32) * jax.lax.rsqrt(var + eps)    # (cout,)
    shift_v = beta.astype(jnp.float32) - mean * scale_v               # (cout,)
    scale = scale_v.reshape(1, cout)
    shift = shift_v.reshape(1, cout)

    # ---- pass 2: recompute matmul + single FMA; store only the real channels ----
    out = pl.pallas_call(
        functools.partial(_conv_bn_apply_kernel, cout=cout),
        grid=(nb,),
        in_specs=[pl.BlockSpec((block_m, kkc), lambda i: (i, 0)),
                  pl.BlockSpec((kkc, cpad), lambda i: (0, 0)),
                  pl.BlockSpec((1, cout), lambda i: (0, 0)),
                  pl.BlockSpec((1, cout), lambda i: (0, 0))],
        out_specs=pl.BlockSpec((block_m, cout), lambda i: (i, 0)),
        out_shape=jax.ShapeDtypeStruct((mp, cout), jnp.float32),
        compiler_params=cparams,
    )(patches, wmat, scale, shift)

    # Un-pad + back to NCHW to preserve the PyTorch module's output layout.
    # (Drop the transpose if the consumer accepts NHWC; emit bf16 if acceptable downstream.)
    out = out[:m].reshape(n, ho, wo, cout)
    return jnp.transpose(out, (0, 3, 1, 2))


def _ref_deconv_bn(x, weight, bias, gamma, beta, stride, padding, eps=1e-5):
    """Pure numpy reference (scatter form of ConvTranspose2d + train-mode BN)."""
    x = np.asarray(x, np.float64)
    weight = np.asarray(weight, np.float64)
    n, cin, h, w = x.shape
    _, cout, k, _ = weight.shape
    ho = (h - 1) * stride - 2 * padding + k
    wo = (w - 1) * stride - 2 * padding + k
    y = np.zeros((n, cout, ho + 2 * padding, wo + 2 * padding))
    for ni in range(n):
        for ih in range(h):
            for iw in range(w):
                contrib = np.einsum('i,iokl->okl', x[ni, :, ih, iw], weight)
                y[ni, :, ih * stride:ih * stride + k, iw * stride:iw * stride + k] += contrib
    y = y[:, :, padding:padding + ho, padding:padding + wo]
    y = y + np.asarray(bias, np.float64)[None, :, None, None]
    mean = y.mean(axis=(0, 2, 3), keepdims=True)
    var = y.var(axis=(0, 2, 3), keepdims=True)
    yn = (y - mean) / np.sqrt(var + eps)
    return yn * np.asarray(gamma, np.float64)[None, :, None, None] \
              + np.asarray(beta, np.float64)[None, :, None, None]


if __name__ == "__main__":
    N, CIN, COUT, H, W = 2, 4, 8, 16, 16
    K, STRIDE, PAD = 3, 2, 1

    key = jax.random.PRNGKey(0)
    kx, kw, kb, kg, kbe = jax.random.split(key, 5)
    x = jax.random.normal(kx, (N, CIN, H, W), jnp.float32)
    weight = 0.1 * jax.random.normal(kw, (CIN, COUT, K, K), jnp.float32)   # ConvTranspose2d weight
    bias = 0.1 * jax.random.normal(kb, (COUT,), jnp.float32)
    gamma = 1.0 + 0.1 * jax.random.normal(kg, (COUT,), jnp.float32)        # BN weight
    beta = 0.1 * jax.random.normal(kbe, (COUT,), jnp.float32)              # BN bias

    out = deconv_batchnorm(x, weight, bias, gamma, beta, stride=STRIDE, padding=PAD)
    out = jax.block_until_ready(out)

    # Reference built from the same bf16-rounded matmul operands the kernel consumes,
    # so the comparison isolates kernel correctness from the intended bf16 quantization.
    x_q = np.asarray(x.astype(jnp.bfloat16).astype(jnp.float32))
    w_q = np.asarray(weight.astype(jnp.bfloat16).astype(jnp.float32))
    ref = _ref_deconv_bn(x_q, w_q, np.asarray(bias), np.asarray(gamma),
                         np.asarray(beta), STRIDE, PAD)

    HO = (H - 1) * STRIDE - 2 * PAD + K
    WO = (W - 1) * STRIDE - 2 * PAD + K
    assert out.shape == ref.shape == (N, COUT, HO, WO)
    np.testing.assert_allclose(np.asarray(out), ref, atol=2e-3, rtol=2e-3)
    print("KERNEL_OK")
</pallas_src>

<mosaic_0001>
module attributes {stable_mosaic.version = 11 : i64} {
  func.func @_conv_stats_kernel(%arg0: i32, %arg1: memref<512x36xbf16, #tpu.memory_space<vmem>>, %arg2: memref<36x128xbf16, #tpu.memory_space<vmem>>, %arg3: memref<1x2x128xf32, #tpu.memory_space<vmem>>) attributes {dimension_semantics = [#tpu.dimension_semantics<parallel>], iteration_bounds = array<i64: 4>, scalar_prefetch = 0 : i64, scratch_operands = 0 : i64, tpu.core_type = #tpu.core_type<tc>, window_params = [{transform_indices = @transform_0, window_bounds = array<i64: 512, 36>}, {pipeline_mode = #tpu.pipeline_mode<synchronous>, transform_indices = @transform_1, window_bounds = array<i64: 36, 128>}, {transform_indices = @transform_2, window_bounds = array<i64: 1, 2, 128>}]} {
    %c0 = arith.constant 0 : index
    %c0_0 = arith.constant 0 : index
    %0 = vector.load %arg1[%c0, %c0_0] : memref<512x36xbf16, #tpu.memory_space<vmem>>, vector<512x36xbf16>
    %c0_1 = arith.constant 0 : index
    %c0_2 = arith.constant 0 : index
    %1 = vector.load %arg2[%c0_1, %c0_2] : memref<36x128xbf16, #tpu.memory_space<vmem>>, vector<36x128xbf16>
    %cst = arith.constant dense<0.000000e+00> : vector<512x128xf32>
    %2 = tpu.matmul %0, %1, %cst {dimension_numbers = #tpu.dot_dimension_numbers<[1], [0], [0], [1], [0, 0, 1, 1], [], []>} : vector<512x36xbf16>, vector<36x128xbf16>, vector<512x128xf32> -> vector<512x128xf32>
    %cst_3 = arith.constant dense<0.000000e+00> : vector<128xf32>
    %3 = vector.multi_reduction <add>, %2, %cst_3 [0] : vector<512x128xf32> to vector<128xf32>
    %4 = vector.shape_cast %3 : vector<128xf32> to vector<1x128xf32>
    %5 = vector.shape_cast %4 : vector<1x128xf32> to vector<1x1x128xf32>
    %c0_4 = arith.constant 0 : index
    %c0_5 = arith.constant 0 : index
    %c0_6 = arith.constant 0 : index
    %6 = vector.load %arg3[%c0_4, %c0_5, %c0_6] : memref<1x2x128xf32, #tpu.memory_space<vmem>>, vector<1x1x128xf32>
    tpu.vector_store %arg3[%c0_4, %c0_5, %c0_6], %5 {strides = array<i32>} : memref<1x2x128xf32, #tpu.memory_space<vmem>>, vector<1x1x128xf32>,
    %7 = arith.mulf %2, %2 : vector<512x128xf32>
    %cst_7 = arith.constant dense<0.000000e+00> : vector<128xf32>
    %8 = vector.multi_reduction <add>, %7, %cst_7 [0] : vector<512x128xf32> to vector<128xf32>
    %9 = vector.shape_cast %8 : vector<128xf32> to vector<1x128xf32>
    %10 = vector.shape_cast %9 : vector<1x128xf32> to vector<1x1x128xf32>
    %c0_8 = arith.constant 0 : index
    %c1 = arith.constant 1 : index
    %c0_9 = arith.constant 0 : index
    %11 = vector.load %arg3[%c0_8, %c1, %c0_9] : memref<1x2x128xf32, #tpu.memory_space<vmem>>, vector<1x1x128xf32>
    tpu.vector_store %arg3[%c0_8, %c1, %c0_9], %10 {strides = array<i32>} : memref<1x2x128xf32, #tpu.memory_space<vmem>>, vector<1x1x128xf32>,
    return
  }
  func.func @transform_0(%arg0: i32) -> (i32, i32) {
    %c0_i32 = arith.constant 0 : i32
    %c0_i32_0 = arith.constant 0 : i32
    return %arg0, %c0_i32 : i32, i32
  }
  func.func @transform_1(%arg0: i32) -> (i32, i32) {
    %c0_i32 = arith.constant 0 : i32
    %c0_i32_0 = arith.constant 0 : i32
    %c0_i32_1 = arith.constant 0 : i32
    return %c0_i32, %c0_i32_0 : i32, i32
  }
  func.func @transform_2(%arg0: i32) -> (i32, i32, i32) {
    %c0_i32 = arith.constant 0 : i32
    %c0_i32_0 = arith.constant 0 : i32
    %c0_i32_1 = arith.constant 0 : i32
    return %arg0, %c0_i32, %c0_i32_0 : i32, i32, i32
  }
}

</mosaic_0001>

<llo_original>
// kernel: tpu_custom_call.1
$region0: #{tpu_custom_call.1}
  #allocation0 [shape = 'u32[]', space=smem, size = 0x4, offset = 0x4, fixed_abs, tag = 'smem constant byte address 0x4 - core index']
  #allocation1 [shape = 'u32[144,128]{1,0:T(1,128)}', space=vmem, size = 0x12000, scoped, tag = 'internal scratch']
  %s0 = inlined_call_operand.vmem [shape: bf16[2048,36], index: 0, kind: input, shape index: {}]
  %s1 = inlined_call_operand.vmem [shape: bf16[36,128], index: 1, kind: input, shape index: {}]
  %s2 = inlined_call_operand.hbm [shape: f32[4,2,128], index: 2, kind: output, shape index: {}]
  %s3 = sld [smem:[#allocation0]]
  $region41: #{tpu_custom_call.1} parent=0
    _
  %s5 = ssub.s32 1, %s3
  %s6 = scalar_select 0, %s5, %s3
  $region1: #{tpu_custom_call.1} parent=0
    #allocation2 [shape = 'u8[2048]{0}', space=vmem, size = 0x800, scoped, tag = 'output window, operand 0']
    #allocation3 [shape = 's32[2]{0}', space=sflag, size = 0x8, scoped, tag = 'scoped memory for tpu_custom_call.1']
    %7 = vsyncpa [#allocation3], 0
    %s8 = scalar_lea.sflag [#allocation3], 1
    %9 = vsyncpa %s8, 0
    loop: start=0, step=1, limit=6
    $region2: #{tpu_custom_call.1} parent=1 // loop_pre_header
      _
    $region3: #{tpu_custom_call.1} parent=1 // loop_header
      %s11 = sphi 0, %s15
      %p12 = scmp.ge.s32.totalorder %s11, 6
      %s21 = sphi 0, %s23
      %s24 = sphi 0, %s21
      %s25 = sphi 0, %s24
      %s41 = sphi 0, %s25
      %s45 = sphi 0, %s45
      %s47 = sphi 0, %s45
      %s48 = sphi 0, %s47
      %s62 = sphi 0, %s48
      %s68 = sphi 0, %s70
      %s71 = sphi 0, %s68
      %s72 = sphi 0, %s71
      %s88 = sphi 0, %s72
    $region4: #{tpu_custom_call.1} parent=1 // loop_header_branch
      %14 = sbr.rel (%p12) target = $region8
    $region5: #{tpu_custom_call.1} parent=1 // loop_body
      %s16 = ssub.s32 %s11, 1
      %s17 = ssub.s32 %s11, 2
      %s18 = sadd.s32 %s11, 1
      %s19 = ssub.s32 %s11, %s18
      %p20 = scmp.eq.s32.totalorder %s19, 0
      %s22 = sadd.s32 %s21, 1
      %s23 = scalar_select %p20, %s21, %s22
      %p26 = pneg %p20
      %p27 = scmp.eq.s32.totalorder %s11, 3
      %p28 = por %p26, %p27
      %p29 = scmp.ne.s32.totalorder %s21, %s24
      %p30 = scmp.eq.s32.totalorder %s11, 0
      %p31 = por %p29, %p30
      %p32 = scmp.ne.s32.totalorder %s21, %s24
      %p33 = scmp.eq.s32.totalorder %s16, 3
      %p34 = por %p32, %p33
      %p35 = scmp.ne.s32.totalorder %s24, %s25
      %p36 = scmp.eq.s32.totalorder %s16, 0
      %p37 = por %p35, %p36
      %p38 = scmp.ne.s32.totalorder %s24, %s25
      %p39 = scmp.eq.s32.totalorder %s17, 3
      %p40 = por %p38, %p39
      %p42 = scmp.ne.s32.totalorder %s25, %s41
      %p43 = scmp.eq.s32.totalorder %s17, 0
      %p44 = por %p42, %p43
      %s46 = sadd.s32 %s45, 1
      %p49 = scmp.eq.s32.totalorder %s11, 3
      %p50 = scmp.ne.s32.totalorder %s45, %s47
      %p51 = scmp.eq.s32.totalorder %s11, 0
      %p52 = por %p50, %p51
      %p53 = scmp.ne.s32.totalorder %s45, %s47
      %p54 = scmp.eq.s32.totalorder %s16, 3
      %p55 = por %p53, %p54
      %p56 = scmp.ne.s32.totalorder %s47, %s48
      %p57 = scmp.eq.s32.totalorder %s16, 0
      %p58 = por %p56, %p57
      %p59 = scmp.ne.s32.totalorder %s47, %s48
      %p60 = scmp.eq.s32.totalorder %s17, 3
      %p61 = por %p59, %p60
      %p63 = scmp.ne.s32.totalorder %s48, %s62
      %p64 = scmp.eq.s32.totalorder %s17, 0
      %p65 = por %p63, %p64
      %s66 = ssub.s32 %s11, %s18
      %p67 = scmp.eq.s32.totalorder %s66, 0
      %s69 = sadd.s32 %s68, 1
      %s70 = scalar_select %p67, %s68, %s69
      %p73 = pneg %p67
      %p74 = scmp.eq.s32.totalorder %s11, 3
      %p75 = por %p73, %p74
      %p76 = scmp.ne.s32.totalorder %s68, %s71
      %p77 = scmp.eq.s32.totalorder %s11, 0
      %p78 = por %p76, %p77
      %p79 = scmp.ne.s32.totalorder %s68, %s71
      %p80 = scmp.eq.s32.totalorder %s16, 3
      %p81 = por %p79, %p80
      %p82 = scmp.ne.s32.totalorder %s71, %s72
      %p83 = scmp.eq.s32.totalorder %s16, 0
      %p84 = por %p82, %p83
      %p85 = scmp.ne.s32.totalorder %s71, %s72
      %p86 = scmp.eq.s32.totalorder %s17, 3
      %p87 = por %p85, %p86
      %p89 = scmp.ne.s32.totalorder %s72, %s88
      %p90 = scmp.eq.s32.totalorder %s17, 0
      %p91 = por %p89, %p90
      %p92 = scmp.le.s32.totalorder 1, %s11
      %p93 = scmp.lt.s32.totalorder %s11, 5
      %p94 = pnand %p92, %p93
      %p95 = pneg %p94
      // Predicated region
      $region9: #{tpu_custom_call.1} parent=5 // pred_check
        _
      $region10: #{tpu_custom_call.1} parent=5 // pred_check_branch
        %97 = sbr.rel (%p94) target = $region12
      $region11: #{tpu_custom_call.1} parent=5 // pred_region
        %s98 = ssub.s32 %s11, 1
        // Predicated region
        $region13: #{tpu_custom_call.1} parent=11 // pred_check
          %p99 = pneg %p58
        $region14: #{tpu_custom_call.1} parent=11 // pred_check_branch
          %101 = sbr.rel (%p99) target = $region16
        $region15: #{tpu_custom_call.1} parent=11 // pred_region
          _
        $region16: #{tpu_custom_call.1} parent=11 // pred_fallthru
          _
      $region12: #{tpu_custom_call.1} parent=5 // pred_fallthru
        _
      %p102 = scmp.lt.s32.totalorder %s11, 4
      // Predicated region
      $region17: #{tpu_custom_call.1} parent=5 // pred_check
        %p103 = pneg %p102
      $region18: #{tpu_custom_call.1} parent=5 // pred_check_branch
        %105 = sbr.rel (%p103) target = $region20
      $region19: #{tpu_custom_call.1} parent=5 // pred_region
        // Predicated region
        $region21: #{tpu_custom_call.1} parent=19 // pred_check
          %p106 = pneg %p31
        $region22: #{tpu_custom_call.1} parent=19 // pred_check_branch
          %108 = sbr.rel (%p106) target = $region24
        $region23: #{tpu_custom_call.1} parent=19 // pred_region
          %s109 = smul.u32 64, %s11
          %p110 = scmp.lt.s32.totalorder %s109, 255
          %s111 = scalar_select %p110, %s109, 255
          %s112 = smul.addr %s111, 4
          %s113 = scalar_lea.vmem %s0, %s112
          %s114 = smul.u32 64, %s11
        $region24: #{tpu_custom_call.1} parent=19 // pred_fallthru
          _
      $region20: #{tpu_custom_call.1} parent=5 // pred_fallthru
        _
      %p115 = scmp.le.s32.totalorder 1, %s11
      %p116 = scmp.lt.s32.totalorder %s11, 5
      %p117 = pnand %p115, %p116
      %p118 = pneg %p117
      // Predicated region
      $region25: #{tpu_custom_call.1} parent=5 // pred_check
        _
      $region26: #{tpu_custom_call.1} parent=5 // pred_check_branch
        %120 = sbr.rel (%p117) target = $region28
      $region27: #{tpu_custom_call.1} parent=5 // pred_region
        %s121 = ssub.s32 %s11, 1
        %s122 = smul.u32 64, %s16
        %p123 = scmp.lt.s32.totalorder %s122, 255
        %s124 = scalar_select %p123, %s122, 255
        %s125 = smul.addr %s124, 4
        %s126 = scalar_lea.vmem %s0, %s125
        %p127 = pneg %p37
        %p128 = pneg %p34
        %p129 = pneg %p58
        %p130 = pneg %p55
        %p131 = pneg %p84
        %p132 = pneg %p81
        %s133 = sand.u32 %s71, 1
        %s134 = scalar_lea.sflag [#allocation3], %s133
        %s135 = sand.u32 %s71, 1
        %s136 = smul.addr %s135, 2
        %s137 = scalar_lea.vmem [#allocation2], %s136
        %s138 = smul.u32 64, %s16
        %p139 = scmp.lt.s32.totalorder %s138, 255
        %s140 = scalar_select %p139, %s138, 255
        %s141 = smul.addr %s140, 4
        %s142 = scalar_lea.vmem %s0, %s141
        %s143 = smul.u32 64, %s16
        %v145 = vld [vmem:[%s142] sm:$0xf]
        %v146 = vld [vmem:[%s142 + $0x4] sm:$0xf]
        %v147 = vld [vmem:[%s142 + $0x8] sm:$0xf]
        %v148 = vld [vmem:[%s142 + $0xc] sm:$0xf]
        %v149 = vld [vmem:[%s142 + $0x10] sm:$0xf]
        %v150 = vld [vmem:[%s142 + $0x14] sm:$0xf]
        %v151 = vld [vmem:[%s142 + $0x18] sm:$0xf]
        %v152 = vld [vmem:[%s142 + $0x1c] sm:$0xf]
        %v153 = vld [vmem:[%s142 + $0x20] sm:$0xf]
        %v154 = vld [vmem:[%s142 + $0x24] sm:$0xf]
        %v155 = vld [vmem:[%s142 + $0x28] sm:$0xf]
        %v156 = vld [vmem:[%s142 + $0x2c] sm:$0xf]
        %v157 = vld [vmem:[%s142 + $0x30] sm:$0xf]
        %v158 = vld [vmem:[%s142 + $0x34] sm:$0xf]
        %v159 = vld [vmem:[%s142 + $0x38] sm:$0xf]
        %v160 = vld [vmem:[%s142 + $0x3c] sm:$0xf]
        %v161 = vld [vmem:[%s142 + $0x40] sm:$0xf]
        %v162 = vld [vmem:[%s142 + $0x44] sm:$0xf]
        %v163 = vld [vmem:[%s142 + $0x48] sm:$0xf]
        %v164 = vld [vmem:[%s142 + $0x4c] sm:$0xf]
        %v165 = vld [vmem:[%s142 + $0x50] sm:$0xf]
        %v166 = vld [vmem:[%s142 + $0x54] sm:$0xf]
        %v167 = vld [vmem:[%s142 + $0x58] sm:$0xf]
        %v168 = vld [vmem:[%s142 + $0x5c] sm:$0xf]
        %v169 = vld [vmem:[%s142 + $0x60] sm:$0xf]
        %v170 = vld [vmem:[%s142 + $0x64] sm:$0xf]
        %v171 = vld [vmem:[%s142 + $0x68] sm:$0xf]
        %v172 = vld [vmem:[%s142 + $0x6c] sm:$0xf]
        %v173 = vld [vmem:[%s142 + $0x70] sm:$0xf]
        %v174 = vld [vmem:[%s142 + $0x74] sm:$0xf]
        %v175 = vld [vmem:[%s142 + $0x78] sm:$0xf]
        %v176 = vld [vmem:[%s142 + $0x7c] sm:$0xf]
        %v177 = vld [vmem:[%s142 + $0x80] sm:$0xf]
        %v178 = vld [vmem:[%s142 + $0x84] sm:$0xf]
        %v179 = vld [vmem:[%s142 + $0x88] sm:$0xf]
        %v180 = vld [vmem:[%s142 + $0x8c] sm:$0xf]
        %v181 = vld [vmem:[%s142 + $0x90] sm:$0xf]
        %v182 = vld [vmem:[%s142 + $0x94] sm:$0xf]
        %v183 = vld [vmem:[%s142 + $0x98] sm:$0xf]
        %v184 = vld [vmem:[%s142 + $0x9c] sm:$0xf]
        %v185 = vld [vmem:[%s142 + $0xa0] sm:$0xf]
        %v186 = vld [vmem:[%s142 + $0xa4] sm:$0xf]
        %v187 = vld [vmem:[%s142 + $0xa8] sm:$0xf]
        %v188 = vld [vmem:[%s142 + $0xac] sm:$0xf]
        %v189 = vld [vmem:[%s142 + $0xb0] sm:$0xf]
        %v190 = vld [vmem:[%s142 + $0xb4] sm:$0xf]
        %v191 = vld [vmem:[%s142 + $0xb8] sm:$0xf]
        %v192 = vld [vmem:[%s142 + $0xbc] sm:$0xf]
        %v193 = vld [vmem:[%s142 + $0xc0] sm:$0xf]
        %v194 = vld [vmem:[%s142 + $0xc4] sm:$0xf]
        %v195 = vld [vmem:[%s142 + $0xc8] sm:$0xf]
        %v196 = vld [vmem:[%s142 + $0xcc] sm:$0xf]
        %v197 = vld [vmem:[%s142 + $0xd0] sm:$0xf]
        %v198 = vld [vmem:[%s142 + $0xd4] sm:$0xf]
        %v199 = vld [vmem:[%s142 + $0xd8] sm:$0xf]
        %v200 = vld [vmem:[%s142 + $0xdc] sm:$0xf]
        %v201 = vld [vmem:[%s142 + $0xe0] sm:$0xf]
        %v202 = vld [vmem:[%s142 + $0xe4] sm:$0xf]
        %v203 = vld [vmem:[%s142 + $0xe8] sm:$0xf]
        %v204 = vld [vmem:[%s142 + $0xec] sm:$0xf]
        %v205 = vld [vmem:[%s142 + $0xf0] sm:$0xf]
        %v206 = vld [vmem:[%s142 + $0xf4] sm:$0xf]
        %v207 = vld [vmem:[%s142 + $0xf8] sm:$0xf]
        %v208 = vld [vmem:[%s142 + $0xfc] sm:$0xf]
        %v209 = vld [vmem:[%s1] sm:$0xf]
        %v210 = vld [vmem:[%s1 + $0x4] sm:$0xf]
        %v211 = vld [vmem:[%s1 + $0x8] sm:$0xf]
        %v212 = vld [vmem:[%s1 + $0xc] sm:$0xf]
        %v213 = vld [vmem:[%s1 + $0x10] sm:$0x3]
        %v278 = vunpack.c.l.b16 %v145
        %v279 = vunpack.c.l.b16 %v146
        %v280 = vunpack.c.l.b16 %v147
        %v281 = vunpack.c.l.b16 %v148
        %v282 = vunpack.c.l.b16 %v149
        %v283 = vunpack.c.l.b16 %v150
        %v284 = vunpack.c.l.b16 %v151
        %v285 = vunpack.c.l.b16 %v152
        %v286 = vunpack.c.l.b16 %v153
        %v287 = vunpack.c.l.b16 %v154
        %v288 = vunpack.c.l.b16 %v155
        %v289 = vunpack.c.l.b16 %v156
        %v290 = vunpack.c.l.b16 %v157
        %v291 = vunpack.c.l.b16 %v158
        %v292 = vunpack.c.l.b16 %v159
        %v293 = vunpack.c.l.b16 %v160
        %v294 = vunpack.c.l.b16 %v161
        %v295 = vunpack.c.l.b16 %v162
        %v296 = vunpack.c.l.b16 %v163
        %v297 = vunpack.c.l.b16 %v164
        %v298 = vunpack.c.l.b16 %v165
        %v299 = vunpack.c.l.b16 %v166
        %v300 = vunpack.c.l.b16 %v167
        %v301 = vunpack.c.l.b16 %v168
        %v302 = vunpack.c.l.b16 %v169
        %v303 = vunpack.c.l.b16 %v170
        %v304 = vunpack.c.l.b16 %v171
        %v305 = vunpack.c.l.b16 %v172
        %v306 = vunpack.c.l.b16 %v173
        %v307 = vunpack.c.l.b16 %v174
        %v308 = vunpack.c.l.b16 %v175
        %v309 = vunpack.c.l.b16 %v176
        %v310 = vunpack.c.l.b16 %v177
        %v311 = vunpack.c.l.b16 %v178
        %v312 = vunpack.c.l.b16 %v179
        %v313 = vunpack.c.l.b16 %v180
        %v314 = vunpack.c.l.b16 %v181
        %v315 = vunpack.c.l.b16 %v182
        %v316 = vunpack.c.l.b16 %v183
        %v317 = vunpack.c.l.b16 %v184
        %v318 = vunpack.c.l.b16 %v185
        %v319 = vunpack.c.l.b16 %v186
        %v320 = vunpack.c.l.b16 %v187
        %v321 = vunpack.c.l.b16 %v188
        %v322 = vunpack.c.l.b16 %v189
        %v323 = vunpack.c.l.b16 %v190
        %v324 = vunpack.c.l.b16 %v191
        %v325 = vunpack.c.l.b16 %v192
        %v326 = vunpack.c.l.b16 %v193
        %v327 = vunpack.c.l.b16 %v194
        %v328 = vunpack.c.l.b16 %v195
        %v329 = vunpack.c.l.b16 %v196
        %v330 = vunpack.c.l.b16 %v197
        %v331 = vunpack.c.l.b16 %v198
        %v332 = vunpack.c.l.b16 %v199
        %v333 = vunpack.c.l.b16 %v200
        %v334 = vunpack.c.l.b16 %v201
        %v335 = vunpack.c.l.b16 %v202
        %v336 = vunpack.c.l.b16 %v203
        %v337 = vunpack.c.l.b16 %v204
        %v338 = vunpack.c.l.b16 %v205
        %v339 = vunpack.c.l.b16 %v206
        %v340 = vunpack.c.l.b16 %v207
        %v341 = vunpack.c.l.b16 %v208
        %v342 = vpack.c.b16 %v279, %v278
        %v343 = vpack.c.b16 %v281, %v280
        %v344 = vpack.c.b16 %v283, %v282
        %v345 = vpack.c.b16 %v285, %v284
        %v346 = vpack.c.b16 %v287, %v286
        %v347 = vpack.c.b16 %v289, %v288
        %v348 = vpack.c.b16 %v291, %v290
        %v349 = vpack.c.b16 %v293, %v292
        %v350 = vpack.c.b16 %v295, %v294
        %v351 = vpack.c.b16 %v297, %v296
        %v352 = vpack.c.b16 %v299, %v298
        %v353 = vpack.c.b16 %v301, %v300
        %v354 = vpack.c.b16 %v303, %v302
        %v355 = vpack.c.b16 %v305, %v304
        %v356 = vpack.c.b16 %v307, %v306
        %v357 = vpack.c.b16 %v309, %v308
        %v358 = vpack.c.b16 %v311, %v310
        %v359 = vpack.c.b16 %v313, %v312
        %v360 = vpack.c.b16 %v315, %v314
        %v361 = vpack.c.b16 %v317, %v316
        %v362 = vpack.c.b16 %v319, %v318
        %v363 = vpack.c.b16 %v321, %v320
        %v364 = vpack.c.b16 %v323, %v322
        %v365 = vpack.c.b16 %v325, %v324
        %v366 = vpack.c.b16 %v327, %v326
        %v367 = vpack.c.b16 %v329, %v328
        %v368 = vpack.c.b16 %v331, %v330
        %v369 = vpack.c.b16 %v333, %v332
        %v370 = vpack.c.b16 %v335, %v334
        %v371 = vpack.c.b16 %v337, %v336
        %v372 = vpack.c.b16 %v339, %v338
        %v373 = vpack.c.b16 %v341, %v340
        %v379 = vunpack.c.l.b16 %v209
        %v380 = vunpack.c.l.b16 %v210
        %v381 = vunpack.c.l.b16 %v211
        %v382 = vunpack.c.l.b16 %v212
        %v383 = vunpack.c.l.b16 %v213
        %v384 = vpack.c.b16 %v380, %v379
        %v385 = vpack.c.b16 %v382, %v381
        %v386 = vpack.c.b16 %v383, %v383
        %vm389 = vcmask 293888
        %v391 = vsel %vm389, %v342, 0
        %v394 = vsel %vm389, %v343, 0
        %v397 = vsel %vm389, %v344, 0
        %v400 = vsel %vm389, %v345, 0
        %v403 = vsel %vm389, %v346, 0
        %v406 = vsel %vm389, %v347, 0
        %v409 = vsel %vm389, %v348, 0
        %v412 = vsel %vm389, %v349, 0
        %v415 = vsel %vm389, %v350, 0
        %v418 = vsel %vm389, %v351, 0
        %v421 = vsel %vm389, %v352, 0
        %v424 = vsel %vm389, %v353, 0
        %v427 = vsel %vm389, %v354, 0
        %v430 = vsel %vm389, %v355, 0
        %v433 = vsel %vm389, %v356, 0
        %v436 = vsel %vm389, %v357, 0
        %v439 = vsel %vm389, %v358, 0
        %v442 = vsel %vm389, %v359, 0
        %v445 = vsel %vm389, %v360, 0
        %v448 = vsel %vm389, %v361, 0
        %v451 = vsel %vm389, %v362, 0
        %v454 = vsel %vm389, %v363, 0
        %v457 = vsel %vm389, %v364, 0
        %v460 = vsel %vm389, %v365, 0
        %v463 = vsel %vm389, %v366, 0
        %v466 = vsel %vm389, %v367, 0
        %v469 = vsel %vm389, %v368, 0
        %v472 = vsel %vm389, %v369, 0
        %v475 = vsel %vm389, %v370, 0
        %v478 = vsel %vm389, %v371, 0
        %v481 = vsel %vm389, %v372, 0
        %v484 = vsel %vm389, %v373, 0
        %vm486 = vcmask 1041408
        %v488 = vsel %vm486, %v386, 0
        %490 = vmatprep.subr.bf16.mxu0 0
        %491 = vmatpush1.bf16.msra.mxu0 0
        %492 = vmatprep.subr.bf16.mxu0 0
        %493 = vmatpush1.bf16.msra.mxu0 0
        %494 = vmatprep.subr.bf16.mxu0 0
        %495 = vmatpush1.bf16.msra.mxu0 0
        %496 = vmatprep.subr.bf16.mxu0 0
        %497 = vmatpush1.bf16.msra.mxu0 0
        %498 = vmatprep.subr.bf16.mxu0 0
        %499 = vmatpush1.bf16.msra.mxu0 0
        %500 = vmatprep.subr.bf16.mxu0 0
        %501 = vmatpush1.bf16.msra.mxu0 %v488
        %502 = vmatprep.subr.bf16.mxu0 0
        %503 = vmatpush1.bf16.msra.mxu0 %v385
        %504 = vmatprep.subr.bf16.mxu0 0
        %505 = vmatpush1.bf16.msra.mxu0 %v384
        %506 = vmatprep.subr.bf16.mxu0 0
        %507 = vmatpush2.bf16.msra.mxu0 0
        %508 = vmatprep.subr.bf16.mxu0 0
        %509 = vmatpush2.bf16.msra.mxu0 0
        %510 = vmatprep.subr.bf16.mxu0 0
        %511 = vmatpush2.bf16.msra.mxu0 0
        %512 = vmatprep.subr.bf16.mxu0 0
        %513 = vmatpush2.bf16.msra.mxu0 0
        %514 = vmatprep.subr.bf16.mxu0 0
        %515 = vmatpush2.bf16.msra.mxu0 0
        %516 = vmatprep.subr.bf16.mxu0 0
        %517 = vmatpush2.bf16.msra.mxu0 0
        %518 = vmatprep.subr.bf16.mxu0 0
        %519 = vmatpush2.bf16.msra.mxu0 0
        %520 = vmatprep.subr.bf16.mxu0 0
        %521 = vmatpush2.bf16.msra.mxu0 0
        %522 = vmatprep.mubr.bf16.mxu0 0
        %523 = vmatmul.mubr.bf16.gmra.mxu0 %v391
        %v524 = vpop.f32.mrf.mxu0
        %v525 = vadd.f32 0.0, %v524
        %v526 = vpop.f32.mrf.mxu0
        %v527 = vpop.f32.mrf.mxu0
        %v528 = vadd.f32 0.0, %v527
        %v529 = vpop.f32.mrf.mxu0
        %530 = vmatprep.mubr.bf16.mxu0 0
        %531 = vmatmul.mubr.bf16.gmra.mxu0 %v394
        %v532 = vpop.f32.mrf.mxu0
        %v533 = vadd.f32 0.0, %v532
        %v534 = vpop.f32.mrf.mxu0
        %v535 = vpop.f32.mrf.mxu0
        %v536 = vadd.f32 0.0, %v535
        %v537 = vpop.f32.mrf.mxu0
        %538 = vmatprep.mubr.bf16.mxu0 0
        %539 = vmatmul.mubr.bf16.gmra.mxu0 %v397
        %v540 = vpop.f32.mrf.mxu0
        %v541 = vadd.f32 0.0, %v540
        %v542 = vpop.f32.mrf.mxu0
        %v543 = vpop.f32.mrf.mxu0
        %v544 = vadd.f32 0.0, %v543
        %v545 = vpop.f32.mrf.mxu0
        %546 = vmatprep.mubr.bf16.mxu0 0
        %547 = vmatmul.mubr.bf16.gmra.mxu0 %v400
        %v548 = vpop.f32.mrf.mxu0
        %v549 = vadd.f32 0.0, %v548
        %v550 = vpop.f32.mrf.mxu0
        %v551 = vpop.f32.mrf.mxu0
        %v552 = vadd.f32 0.0, %v551
        %v553 = vpop.f32.mrf.mxu0
        %554 = vmatprep.mubr.bf16.mxu0 0
        %555 = vmatmul.mubr.bf16.gmra.mxu0 %v403
        %v556 = vpop.f32.mrf.mxu0
        %v557 = vadd.f32 0.0, %v556
        %v558 = vpop.f32.mrf.mxu0
        %v559 = vpop.f32.mrf.mxu0
        %v560 = vadd.f32 0.0, %v559
        %v561 = vpop.f32.mrf.mxu0
        %562 = vmatprep.mubr.bf16.mxu0 0
        %563 = vmatmul.mubr.bf16.gmra.mxu0 %v406
        %v564 = vpop.f32.mrf.mxu0
        %v565 = vadd.f32 0.0, %v564
        %v566 = vpop.f32.mrf.mxu0
        %v567 = vpop.f32.mrf.mxu0
        %v568 = vadd.f32 0.0, %v567
        %v569 = vpop.f32.mrf.mxu0
        %570 = vmatprep.mubr.bf16.mxu0 0
        %571 = vmatmul.mubr.bf16.gmra.mxu0 %v409
        %v572 = vpop.f32.mrf.mxu0
        %v573 = vadd.f32 0.0, %v572
        %v574 = vpop.f32.mrf.mxu0
        %v575 = vpop.f32.mrf.mxu0
        %v576 = vadd.f32 0.0, %v575
        %v577 = vpop.f32.mrf.mxu0
        %578 = vmatprep.mubr.bf16.mxu0 0
        %579 = vmatmul.mubr.bf16.gmra.mxu0 %v412
        %v580 = vpop.f32.mrf.mxu0
        %v581 = vadd.f32 0.0, %v580
        %v582 = vpop.f32.mrf.mxu0
        %v583 = vpop.f32.mrf.mxu0
        %v584 = vadd.f32 0.0, %v583
        %v585 = vpop.f32.mrf.mxu0
        %586 = vmatprep.mubr.bf16.mxu0 0
        %587 = vmatmul.mubr.bf16.gmra.mxu0 %v415
        %v588 = vpop.f32.mrf.mxu0
        %v589 = vadd.f32 0.0, %v588
        %v590 = vpop.f32.mrf.mxu0
        %v591 = vpop.f32.mrf.mxu0
        %v592 = vadd.f32 0.0, %v591
        %v593 = vpop.f32.mrf.mxu0
        %594 = vmatprep.mubr.bf16.mxu0 0
        %595 = vmatmul.mubr.bf16.gmra.mxu0 %v418
        %v596 = vpop.f32.mrf.mxu0
        %v597 = vadd.f32 0.0, %v596
        %v598 = vpop.f32.mrf.mxu0
        %v599 = vpop.f32.mrf.mxu0
        %v600 = vadd.f32 0.0, %v599
        %v601 = vpop.f32.mrf.mxu0
        %602 = vmatprep.mubr.bf16.mxu0 0
        %603 = vmatmul.mubr.bf16.gmra.mxu0 %v421
        %v604 = vpop.f32.mrf.mxu0
        %v605 = vadd.f32 0.0, %v604
        %v606 = vpop.f32.mrf.mxu0
        %v607 = vpop.f32.mrf.mxu0
        %v608 = vadd.f32 0.0, %v607
        %v609 = vpop.f32.mrf.mxu0
        %610 = vmatprep.mubr.bf16.mxu0 0
        %611 = vmatmul.mubr.bf16.gmra.mxu0 %v424
        %v612 = vpop.f32.mrf.mxu0
        %v613 = vadd.f32 0.0, %v612
        %v614 = vpop.f32.mrf.mxu0
        %v615 = vpop.f32.mrf.mxu0
        %v616 = vadd.f32 0.0, %v615
        %v617 = vpop.f32.mrf.mxu0
        %618 = vmatprep.mubr.bf16.mxu0 0
        %619 = vmatmul.mubr.bf16.gmra.mxu0 %v427
        %v620 = vpop.f32.mrf.mxu0
        %v621 = vadd.f32 0.0, %v620
        %v622 = vpop.f32.mrf.mxu0
        %v623 = vpop.f32.mrf.mxu0
        %v624 = vadd.f32 0.0, %v623
        %v625 = vpop.f32.mrf.mxu0
        %626 = vmatprep.mubr.bf16.mxu0 0
        %627 = vmatmul.mubr.bf16.gmra.mxu0 %v430
        %v628 = vpop.f32.mrf.mxu0
        %v629 = vadd.f32 0.0, %v628
        %v630 = vpop.f32.mrf.mxu0
        %v631 = vpop.f32.mrf.mxu0
        %v632 = vadd.f32 0.0, %v631
        %v633 = vpop.f32.mrf.mxu0
        %634 = vmatprep.mubr.bf16.mxu0 0
        %635 = vmatmul.mubr.bf16.gmra.mxu0 %v433
        %v636 = vpop.f32.mrf.mxu0
        %v637 = vadd.f32 0.0, %v636
        %v638 = vpop.f32.mrf.mxu0
        %v639 = vpop.f32.mrf.mxu0
        %v640 = vadd.f32 0.0, %v639
        %v641 = vpop.f32.mrf.mxu0
        %642 = vmatprep.mubr.bf16.mxu0 0
        %643 = vmatmul.mubr.bf16.gmra.mxu0 %v436
        %v644 = vpop.f32.mrf.mxu0
        %v645 = vadd.f32 0.0, %v644
        %v646 = vpop.f32.mrf.mxu0
        %v647 = vpop.f32.mrf.mxu0
        %v648 = vadd.f32 0.0, %v647
        %v649 = vpop.f32.mrf.mxu0
        %650 = vmatprep.mubr.bf16.mxu0 0
        %651 = vmatmul.mubr.bf16.gmra.mxu0 %v439
        %v652 = vpop.f32.mrf.mxu0
        %v653 = vadd.f32 0.0, %v652
        %v654 = vpop.f32.mrf.mxu0
        %v655 = vpop.f32.mrf.mxu0
        %v656 = vadd.f32 0.0, %v655
        %v657 = vpop.f32.mrf.mxu0
        %658 = vmatprep.mubr.bf16.mxu0 0
        %659 = vmatmul.mubr.bf16.gmra.mxu0 %v442
        %v660 = vpop.f32.mrf.mxu0
        %v661 = vadd.f32 0.0, %v660
        %v662 = vpop.f32.mrf.mxu0
        %v663 = vpop.f32.mrf.mxu0
        %v664 = vadd.f32 0.0, %v663
        %v665 = vpop.f32.mrf.mxu0
        %666 = vmatprep.mubr.bf16.mxu0 0
        %667 = vmatmul.mubr.bf16.gmra.mxu0 %v445
        %v668 = vpop.f32.mrf.mxu0
        %v669 = vadd.f32 0.0, %v668
        %v670 = vpop.f32.mrf.mxu0
        %v671 = vpop.f32.mrf.mxu0
        %v672 = vadd.f32 0.0, %v671
        %v673 = vpop.f32.mrf.mxu0
        %674 = vmatprep.mubr.bf16.mxu0 0
        %675 = vmatmul.mubr.bf16.gmra.mxu0 %v448
        %v676 = vpop.f32.mrf.mxu0
        %v677 = vadd.f32 0.0, %v676
        %v678 = vpop.f32.mrf.mxu0
        %v679 = vpop.f32.mrf.mxu0
        %v680 = vadd.f32 0.0, %v679
        %v681 = vpop.f32.mrf.mxu0
        %682 = vmatprep.mubr.bf16.mxu0 0
        %683 = vmatmul.mubr.bf16.gmra.mxu0 %v451
        %v684 = vpop.f32.mrf.mxu0
        %v685 = vadd.f32 0.0, %v684
        %v686 = vpop.f32.mrf.mxu0
        %v687 = vpop.f32.mrf.mxu0
        %v688 = vadd.f32 0.0, %v687
        %v689 = vpop.f32.mrf.mxu0
        %690 = vmatprep.mubr.bf16.mxu0 0
        %691 = vmatmul.mubr.bf16.gmra.mxu0 %v454
        %v692 = vpop.f32.mrf.mxu0
        %v693 = vadd.f32 0.0, %v692
        %v694 = vpop.f32.mrf.mxu0
        %v695 = vpop.f32.mrf.mxu0
        %v696 = vadd.f32 0.0, %v695
        %v697 = vpop.f32.mrf.mxu0
        %698 = vmatprep.mubr.bf16.mxu0 0
        %699 = vmatmul.mubr.bf16.gmra.mxu0 %v457
        %v700 = vpop.f32.mrf.mxu0
        %v701 = vadd.f32 0.0, %v700
        %v702 = vpop.f32.mrf.mxu0
        %v703 = vpop.f32.mrf.mxu0
        %v704 = vadd.f32 0.0, %v703
        %v705 = vpop.f32.mrf.mxu0
        %706 = vmatprep.mubr.bf16.mxu0 0
        %707 = vmatmul.mubr.bf16.gmra.mxu0 %v460
        %v708 = vpop.f32.mrf.mxu0
        %v709 = vadd.f32 0.0, %v708
        %v710 = vpop.f32.mrf.mxu0
        %v711 = vpop.f32.mrf.mxu0
        %v712 = vadd.f32 0.0, %v711
        %v713 = vpop.f32.mrf.mxu0
        %714 = vmatprep.mubr.bf16.mxu0 0
        %715 = vmatmul.mubr.bf16.gmra.mxu0 %v463
        %v716 = vpop.f32.mrf.mxu0
        %v717 = vadd.f32 0.0, %v716
        %v718 = vpop.f32.mrf.mxu0
        %v719 = vpop.f32.mrf.mxu0
        %v720 = vadd.f32 0.0, %v719
        %v721 = vpop.f32.mrf.mxu0
        %722 = vmatprep.mubr.bf16.mxu0 0
        %723 = vmatmul.mubr.bf16.gmra.mxu0 %v466
        %v724 = vpop.f32.mrf.mxu0
        %v725 = vadd.f32 0.0, %v724
        %v726 = vpop.f32.mrf.mxu0
        %v727 = vpop.f32.mrf.mxu0
        %v728 = vadd.f32 0.0, %v727
        %v729 = vpop.f32.mrf.mxu0
        %730 = vmatprep.mubr.bf16.mxu0 0
        %731 = vmatmul.mubr.bf16.gmra.mxu0 %v469
        %v732 = vpop.f32.mrf.mxu0
        %v733 = vadd.f32 0.0, %v732
        %v734 = vpop.f32.mrf.mxu0
        %v735 = vpop.f32.mrf.mxu0
        %v736 = vadd.f32 0.0, %v735
        %v737 = vpop.f32.mrf.mxu0
        %738 = vmatprep.mubr.bf16.mxu0 0
        %739 = vmatmul.mubr.bf16.gmra.mxu0 %v472
        %v740 = vpop.f32.mrf.mxu0
        %v741 = vadd.f32 0.0, %v740
        %v742 = vpop.f32.mrf.mxu0
        %v743 = vpop.f32.mrf.mxu0
        %v744 = vadd.f32 0.0, %v743
        %v745 = vpop.f32.mrf.mxu0
        %746 = vmatprep.mubr.bf16.mxu0 0
        %747 = vmatmul.mubr.bf16.gmra.mxu0 %v475
        %v748 = vpop.f32.mrf.mxu0
        %v749 = vadd.f32 0.0, %v748
        %v750 = vpop.f32.mrf.mxu0
        %v751 = vpop.f32.mrf.mxu0
        %v752 = vadd.f32 0.0, %v751
        %v753 = vpop.f32.mrf.mxu0
        %754 = vmatprep.mubr.bf16.mxu0 0
        %755 = vmatmul.mubr.bf16.gmra.mxu0 %v478
        %v756 = vpop.f32.mrf.mxu0
        %v757 = vadd.f32 0.0, %v756
        %v758 = vpop.f32.mrf.mxu0
        %v759 = vpop.f32.mrf.mxu0
        %v760 = vadd.f32 0.0, %v759
        %v761 = vpop.f32.mrf.mxu0
        %762 = vmatprep.mubr.bf16.mxu0 0
        %763 = vmatmul.mubr.bf16.gmra.mxu0 %v481
        %v764 = vpop.f32.mrf.mxu0
        %v765 = vadd.f32 0.0, %v764
        %v766 = vpop.f32.mrf.mxu0
        %v767 = vpop.f32.mrf.mxu0
        %v768 = vadd.f32 0.0, %v767
        %v769 = vpop.f32.mrf.mxu0
        %770 = vmatprep.mubr.bf16.mxu0 0
        %771 = vmatmul.mubr.bf16.gmra.mxu0 %v484
        %v772 = vpop.f32.mrf.mxu0
        %v773 = vadd.f32 0.0, %v772
        %v774 = vpop.f32.mrf.mxu0
        %v775 = vpop.f32.mrf.mxu0
        %v776 = vadd.f32 0.0, %v775
        %v777 = vpop.f32.mrf.mxu0
        %778 = vdwg.mxu0
        %v779 = vadd.f32 %v525, %v528
        %v780 = vadd.f32 %v779, %v533
        %v781 = vadd.f32 %v780, %v536
        %v782 = vadd.f32 %v781, %v541
        %v783 = vadd.f32 %v782, %v544
        %v784 = vadd.f32 %v783, %v549
        %v785 = vadd.f32 %v784, %v552
        %v786 = vadd.f32 %v785, %v557
        %v787 = vadd.f32 %v786, %v560
        %v788 = vadd.f32 %v787, %v565
        %v789 = vadd.f32 %v788, %v568
        %v790 = vadd.f32 %v789, %v573
        %v791 = vadd.f32 %v790, %v576
        %v792 = vadd.f32 %v791, %v581
        %v793 = vadd.f32 %v792, %v584
        %v794 = vadd.f32 %v793, %v589
        %v795 = vadd.f32 %v794, %v592
        %v796 = vadd.f32 %v795, %v597
        %v797 = vadd.f32 %v796, %v600
        %v798 = vadd.f32 %v797, %v605
        %v799 = vadd.f32 %v798, %v608
        %v800 = vadd.f32 %v799, %v613
        %v801 = vadd.f32 %v800, %v616
        %v802 = vadd.f32 %v801, %v621
        %v803 = vadd.f32 %v802, %v624
        %v804 = vadd.f32 %v803, %v629
        %v805 = vadd.f32 %v804, %v632
        %v806 = vadd.f32 %v805, %v637
        %v807 = vadd.f32 %v806, %v640
        %v808 = vadd.f32 %v807, %v645
        %v809 = vadd.f32 %v808, %v648
        %v810 = vadd.f32 %v809, %v653
        %v811 = vadd.f32 %v810, %v656
        %v812 = vadd.f32 %v811, %v661
        %v813 = vadd.f32 %v812, %v664
        %v814 = vadd.f32 %v813, %v669
        %v815 = vadd.f32 %v814, %v672
        %v816 = vadd.f32 %v815, %v677
        %v817 = vadd.f32 %v816, %v680
        %v818 = vadd.f32 %v817, %v685
        %v819 = vadd.f32 %v818, %v688
        %v820 = vadd.f32 %v819, %v693
        %v821 = vadd.f32 %v820, %v696
        %v822 = vadd.f32 %v821, %v701
        %v823 = vadd.f32 %v822, %v704
        %v824 = vadd.f32 %v823, %v709
        %v825 = vadd.f32 %v824, %v712
        %v826 = vadd.f32 %v825, %v717
        %v827 = vadd.f32 %v826, %v720
        %v828 = vadd.f32 %v827, %v725
        %v829 = vadd.f32 %v828, %v728
        %v830 = vadd.f32 %v829, %v733
        %v831 = vadd.f32 %v830, %v736
        %v832 = vadd.f32 %v831, %v741
        %v833 = vadd.f32 %v832, %v744
        %v834 = vadd.f32 %v833, %v749
        %v835 = vadd.f32 %v834, %v752
        %v836 = vadd.f32 %v835, %v757
        %v837 = vadd.f32 %v836, %v760
        %v838 = vadd.f32 %v837, %v765
        %v839 = vadd.f32 %v838, %v768
        %v840 = vadd.f32 %v839, %v773
        %v841 = vadd.f32 %v840, %v776
        %v842 = vrot.slane %v841, 4
        %v843 = vadd.f32 %v841, %v842
        %v844 = vrot.slane %v843, 2
        %v845 = vadd.f32 %v843, %v844
        %v846 = vrot.slane %v845, 1
        %v847 = vadd.f32 %v845, %v846
        %848 = vst [vmem:[%s137] sm:$0x1] %v847
        %v849 = vmul.f32 %v525, %v525
        %v850 = vmul.f32 %v528, %v528
        %v851 = vmul.f32 %v533, %v533
        %v852 = vmul.f32 %v536, %v536
        %v853 = vmul.f32 %v541, %v541
        %v854 = vmul.f32 %v544, %v544
        %v855 = vmul.f32 %v549, %v549
        %v856 = vmul.f32 %v552, %v552
        %v857 = vmul.f32 %v557, %v557
        %v858 = vmul.f32 %v560, %v560
        %v859 = vmul.f32 %v565, %v565
        %v860 = vmul.f32 %v568, %v568
        %v861 = vmul.f32 %v573, %v573
        %v862 = vmul.f32 %v576, %v576
        %v863 = vmul.f32 %v581, %v581
        %v864 = vmul.f32 %v584, %v584
        %v865 = vmul.f32 %v589, %v589
        %v866 = vmul.f32 %v592, %v592
        %v867 = vmul.f32 %v597, %v597
        %v868 = vmul.f32 %v600, %v600
        %v869 = vmul.f32 %v605, %v605
        %v870 = vmul.f32 %v608, %v608
        %v871 = vmul.f32 %v613, %v613
        %v872 = vmul.f32 %v616, %v616
        %v873 = vmul.f32 %v621, %v621
        %v874 = vmul.f32 %v624, %v624
        %v875 = vmul.f32 %v629, %v629
        %v876 = vmul.f32 %v632, %v632
        %v877 = vmul.f32 %v637, %v637
        %v878 = vmul.f32 %v640, %v640
        %v879 = vmul.f32 %v645, %v645
        %v880 = vmul.f32 %v648, %v648
        %v881 = vmul.f32 %v653, %v653
        %v882 = vmul.f32 %v656, %v656
        %v883 = vmul.f32 %v661, %v661
        %v884 = vmul.f32 %v664, %v664
        %v885 = vmul.f32 %v669, %v669
        %v886 = vmul.f32 %v672, %v672
        %v887 = vmul.f32 %v677, %v677
        %v888 = vmul.f32 %v680, %v680
        %v889 = vmul.f32 %v685, %v685
        %v890 = vmul.f32 %v688, %v688
        %v891 = vmul.f32 %v693, %v693
        %v892 = vmul.f32 %v696, %v696
        %v893 = vmul.f32 %v701, %v701
        %v894 = vmul.f32 %v704, %v704
        %v895 = vmul.f32 %v709, %v709
        %v896 = vmul.f32 %v712, %v712
        %v897 = vmul.f32 %v717, %v717
        %v898 = vmul.f32 %v720, %v720
        %v899 = vmul.f32 %v725, %v725
        %v900 = vmul.f32 %v728, %v728
        %v901 = vmul.f32 %v733, %v733
        %v902 = vmul.f32 %v736, %v736
        %v903 = vmul.f32 %v741, %v741
        %v904 = vmul.f32 %v744, %v744
        %v905 = vmul.f32 %v749, %v749
        %v906 = vmul.f32 %v752, %v752
        %v907 = vmul.f32 %v757, %v757
        %v908 = vmul.f32 %v760, %v760
        %v909 = vmul.f32 %v765, %v765
        %v910 = vmul.f32 %v768, %v768
        %v911 = vmul.f32 %v773, %v773
        %v912 = vmul.f32 %v776, %v776
        %v913 = vadd.f32 %v849, %v850
        %v914 = vadd.f32 %v913, %v851
        %v915 = vadd.f32 %v914, %v852
        %v916 = vadd.f32 %v915, %v853
        %v917 = vadd.f32 %v916, %v854
        %v918 = vadd.f32 %v917, %v855
        %v919 = vadd.f32 %v918, %v856
        %v920 = vadd.f32 %v919, %v857
        %v921 = vadd.f32 %v920, %v858
        %v922 = vadd.f32 %v921, %v859
        %v923 = vadd.f32 %v922, %v860
        %v924 = vadd.f32 %v923, %v861
        %v925 = vadd.f32 %v924, %v862
        %v926 = vadd.f32 %v925, %v863
        %v927 = vadd.f32 %v926, %v864
        %v928 = vadd.f32 %v927, %v865
        %v929 = vadd.f32 %v928, %v866
        %v930 = vadd.f32 %v929, %v867
        %v931 = vadd.f32 %v930, %v868
        %v932 = vadd.f32 %v931, %v869
        %v933 = vadd.f32 %v932, %v870
        %v934 = vadd.f32 %v933, %v871
        %v935 = vadd.f32 %v934, %v872
        %v936 = vadd.f32 %v935, %v873
        %v937 = vadd.f32 %v936, %v874
        %v938 = vadd.f32 %v937, %v875
        %v939 = vadd.f32 %v938, %v876
        %v940 = vadd.f32 %v939, %v877
        %v941 = vadd.f32 %v940, %v878
        %v942 = vadd.f32 %v941, %v879
        %v943 = vadd.f32 %v942, %v880
        %v944 = vadd.f32 %v943, %v881
        %v945 = vadd.f32 %v944, %v882
        %v946 = vadd.f32 %v945, %v883
        %v947 = vadd.f32 %v946, %v884
        %v948 = vadd.f32 %v947, %v885
        %v949 = vadd.f32 %v948, %v886
        %v950 = vadd.f32 %v949, %v887
        %v951 = vadd.f32 %v950, %v888
        %v952 = vadd.f32 %v951, %v889
        %v953 = vadd.f32 %v952, %v890
        %v954 = vadd.f32 %v953, %v891
        %v955 = vadd.f32 %v954, %v892
        %v956 = vadd.f32 %v955, %v893
        %v957 = vadd.f32 %v956, %v894
        %v958 = vadd.f32 %v957, %v895
        %v959 = vadd.f32 %v958, %v896
        %v960 = vadd.f32 %v959, %v897
        %v961 = vadd.f32 %v960, %v898
        %v962 = vadd.f32 %v961, %v899
        %v963 = vadd.f32 %v962, %v900
        %v964 = vadd.f32 %v963, %v901
        %v965 = vadd.f32 %v964, %v902
        %v966 = vadd.f32 %v965, %v903
        %v967 = vadd.f32 %v966, %v904
        %v968 = vadd.f32 %v967, %v905
        %v969 = vadd.f32 %v968, %v906
        %v970 = vadd.f32 %v969, %v907
        %v971 = vadd.f32 %v970, %v908
        %v972 = vadd.f32 %v971, %v909
        %v973 = vadd.f32 %v972, %v910
        %v974 = vadd.f32 %v973, %v911
        %v975 = vadd.f32 %v974, %v912
        %v976 = vrot.slane %v975, 4
        %v977 = vadd.f32 %v975, %v976
        %v978 = vrot.slane %v977, 2
        %v979 = vadd.f32 %v977, %v978
        %v980 = vrot.slane %v979, 1
        %v981 = vadd.f32 %v979, %v980
        %982 = vst [vmem:[%s137 + $0x1] sm:$0x1] %v981
        %s983 = sand.u32 %s71, 1
        %s984 = scalar_lea.sflag [#allocation3], %s983
        %s985 = sand.u32 %s71, 1
        %s986 = smul.addr %s985, 2
        %s987 = scalar_lea.vmem [#allocation2], %s986
        // Predicated region
        $region29: #{tpu_custom_call.1} parent=27 // pred_check
          %p988 = pneg %p81
        $region30: #{tpu_custom_call.1} parent=27 // pred_check_branch
          %990 = sbr.rel (%p988) target = $region32
        $region31: #{tpu_custom_call.1} parent=27 // pred_region
          %s992 = ssub.s32 32, 32
          %993 = vsyncadd %s984, %s992
          %s994 = smul.addr %s16, 32
          %s995 = scalar_lea.hbm %s2, %s994
          %s997 = sshll.u32 %s987, 4
          %s998 = int_to_ptr.vmem [resolvable:$true] %s997
          %1000 = dma.vmem_to_hbm [thread:$0]  %s998, 32, %s995, %s984
        $region32: #{tpu_custom_call.1} parent=27 // pred_fallthru
          _
      $region28: #{tpu_custom_call.1} parent=5 // pred_fallthru
        _
      %p1001 = scmp.le.s32.totalorder 2, %s11
      // Predicated region
      $region33: #{tpu_custom_call.1} parent=5 // pred_check
        %p1002 = pneg %p1001
      $region34: #{tpu_custom_call.1} parent=5 // pred_check_branch
        %1004 = sbr.rel (%p1002) target = $region36
      $region35: #{tpu_custom_call.1} parent=5 // pred_region
        %s1005 = ssub.s32 %s11, 2
        // Predicated region
        $region37: #{tpu_custom_call.1} parent=35 // pred_check
          %p1006 = pneg %p87
        $region38: #{tpu_custom_call.1} parent=35 // pred_check_branch
          %1008 = sbr.rel (%p1006) target = $region40
        $region39: #{tpu_custom_call.1} parent=35 // pred_region
          %s1009 = sand.u32 %s72, 1
          %s1010 = scalar_lea.sflag [#allocation3], %s1009
          %s1011 = sand.u32 %s72, 1
          %s1012 = smul.addr %s1011, 2
          %s1013 = scalar_lea.vmem [#allocation2], %s1012
          %1014 = dma.done %s1010, 32
        $region40: #{tpu_custom_call.1} parent=35 // pred_fallthru
          _
      $region36: #{tpu_custom_call.1} parent=5 // pred_fallthru
        _
    $region6: #{tpu_custom_call.1} parent=1 // loop_footer
      %s15 = sadd.s32 1, %s11
    $region7: #{tpu_custom_call.1} parent=1 // loop_footer_branch
      %10 = sbr.rel target = $region3
    $region8: #{tpu_custom_call.1} parent=1 // loop_exit
      _
    %1015 = vsyncpa [#allocation3], 1
    %s1016 = scalar_lea.sflag [#allocation3], 1
    %1017 = vsyncpa %s1016, 1

</llo_original>
